<compile_context>
chip_gen: v7x
topology: tpu7x:2x2x1
jax: 0.10.0
libtpu: 0.0.40
codegen_flags: <defaults>
</compile_context>

<pallas_src>
import functools
import math

import jax
import jax.numpy as jnp
from jax.experimental import pallas as pl
from jax.experimental.pallas import tpu as pltpu


# ----------------------------------------------------------------------------
# helpers
# ----------------------------------------------------------------------------
def _round_up(x: int, m: int) -> int:
    return ((x + m - 1) // m) * m


def _pick_tile(dim: int, max_tile: int, align: int) -> int:
    """Largest tile <= max_tile, aligned to `align`, preferring exact divisors."""
    dim_p = _round_up(dim, align)
    if dim_p <= max_tile:
        return dim_p
    for t in range(max_tile, align - 1, -align):
        if dim_p % t == 0:
            return t
    return max_tile


# ----------------------------------------------------------------------------
# Kernel 1: tiled matmul + bias   (y = x @ w + b, w stored as (K, N))
# ----------------------------------------------------------------------------
def _matmul_bias_kernel(x_ref, w_ref, b_ref, o_ref, acc_ref):
    k = pl.program_id(2)

    @pl.when(k == 0)
    def _():
        acc_ref[...] = jnp.zeros_like(acc_ref)

    acc_ref[...] += jnp.dot(
        x_ref[...], w_ref[...], preferred_element_type=jnp.float32
    )

    @pl.when(k == pl.num_programs(2) - 1)
    def _():
        o_ref[...] = (acc_ref[...] + b_ref[...].astype(jnp.float32)).astype(
            o_ref.dtype
        )


def linear_pallas(x2d, w, b=None, *, tm_max=512, tn_max=512, tk_max=512):
    """y = x2d @ w + b.   x2d: (M, K), w: (K, N) (pre-transposed), b: (N,) or None."""
    M, K = x2d.shape
    K2, N = w.shape
    assert K2 == K
    if b is None:
        b = jnp.zeros((N,), dtype=x2d.dtype)

    tm = _pick_tile(M, tm_max, 8)
    tn = _pick_tile(N, tn_max, 128)
    tk = _pick_tile(K, tk_max, 128)
    Mp, Np, Kp = _round_up(M, tm), _round_up(N, tn), _round_up(K, tk)

    xp = jnp.pad(x2d, ((0, Mp - M), (0, Kp - K))) if (Mp != M or Kp != K) else x2d
    wp = jnp.pad(w, ((0, Kp - K), (0, Np - N))) if (Kp != K or Np != N) else w
    bp = (jnp.pad(b, (0, Np - N)) if Np != N else b).reshape(1, Np)

    grid = (Mp // tm, Np // tn, Kp // tk)
    out = pl.pallas_call(
        _matmul_bias_kernel,
        out_shape=jax.ShapeDtypeStruct((Mp, Np), x2d.dtype),
        grid_spec=pltpu.PrefetchScalarGridSpec(
            num_scalar_prefetch=0,
            grid=grid,
            in_specs=[
                pl.BlockSpec((tm, tk), lambda i, j, k: (i, k)),
                pl.BlockSpec((tk, tn), lambda i, j, k: (k, j)),
                pl.BlockSpec((1, tn), lambda i, j, k: (0, j)),
            ],
            out_specs=pl.BlockSpec((tm, tn), lambda i, j, k: (i, j)),
            scratch_shapes=[pltpu.VMEM((tm, tn), jnp.float32)],
        ),
        compiler_params=pltpu.CompilerParams(
            dimension_semantics=("parallel", "parallel", "arbitrary"),
        ),
        cost_estimate=pl.CostEstimate(
            flops=2 * Mp * Np * Kp,
            transcendentals=0,
            bytes_accessed=x2d.dtype.itemsize * (Mp * Kp + Kp * Np + Mp * Np),
        ),
    )(xp, wp, bp)
    return out[:M, :N]


# ----------------------------------------------------------------------------
# Kernel 2: LayerNorm over the last dim (rows tiled over the grid)
# ----------------------------------------------------------------------------
def _layernorm_kernel(x_ref, g_ref, b_ref, o_ref):
    x = x_ref[...].astype(jnp.float32)
    mu = jnp.mean(x, axis=-1, keepdims=True)
    xc = x - mu
    var = jnp.mean(xc * xc, axis=-1, keepdims=True)
    y = xc * jax.lax.rsqrt(var + 1e-5)
    y = y * g_ref[...].astype(jnp.float32) + b_ref[...].astype(jnp.float32)
    o_ref[...] = y.astype(o_ref.dtype)


def layernorm_pallas(x2d, gamma, beta):
    M, D = x2d.shape
    tm = _pick_tile(M, 512, 8)   # larger row tiles: LN is HBM-bound
    Mp = _round_up(M, tm)
    xp = jnp.pad(x2d, ((0, Mp - M), (0, 0))) if Mp != M else x2d
    g2 = gamma.reshape(1, D)
    b2 = beta.reshape(1, D)

    out = pl.pallas_call(
        _layernorm_kernel,
        out_shape=jax.ShapeDtypeStruct((Mp, D), x2d.dtype),
        grid_spec=pltpu.PrefetchScalarGridSpec(
            num_scalar_prefetch=0,
            grid=(Mp // tm,),
            in_specs=[
                pl.BlockSpec((tm, D), lambda i: (i, 0)),
                pl.BlockSpec((1, D), lambda i: (0, 0)),
                pl.BlockSpec((1, D), lambda i: (0, 0)),
            ],
            out_specs=pl.BlockSpec((tm, D), lambda i: (i, 0)),
        ),
        compiler_params=pltpu.CompilerParams(dimension_semantics=("parallel",)),
    )(xp, g2, b2)
    return out[:M]


# ----------------------------------------------------------------------------
# Kernel 3: fused per-batch attention
#   content-score + pos-score + relative-shift + softmax + PV, all in VMEM.
# ----------------------------------------------------------------------------
def _rel_shift_vmem(x):
    """Transformer-XL relative shift of an in-VMEM (S, S) score matrix.

    Exactly reproduces the torch pad+view trick, including the wrapped values
    in the upper-triangular region.  Implemented as a per-row barrel shifter:
    log2(S) static lane rotations + selects (XLU/VPU, no HBM traffic).
    """
    S = x.shape[0]
    if S == 1:
        return x
    zcol = jnp.zeros((S, 1), x.dtype)
    # row i of `nxt` holds row i+1 of x (last row wraps but is never selected)
    nxt = jnp.concatenate([x[1:, :], x[:1, :]], axis=0)
    # W[i, :] = [ x[i, :], 0, x[i+1, :S-1] ]   (width 2S)
    w = jnp.concatenate([x, zcol, nxt[:, : S - 1]], axis=1)           # (S, 2S)
    # out[i, j] = W[i, j + (S-1-i)]  -> per-row left rotation by amt = S-1-i
    row = jax.lax.broadcasted_iota(jnp.int32, (S, 2 * S), 0)
    amt = (S - 1) - row
    b = 1
    while b < S:
        rolled = jnp.concatenate([w[:, b:], w[:, :b]], axis=1)        # left rot by b
        w = jnp.where((amt & b) != 0, rolled, w)
        b <<= 1
    return w[:, :S]


def _fused_attn_kernel(q_ref, k_ref, v_ref, p_ref, u_ref, vb_ref, o_ref,
                       *, num_heads, d_head, scale):
    # q/k/v/o blocks: (1, S, D); p: (S, D); u/vb: (H, dh)
    q_all = q_ref[0].astype(jnp.float32) * scale     # fold 1/sqrt(d_model) into q
    k_all = k_ref[0].astype(jnp.float32)
    v_all = v_ref[0].astype(jnp.float32)
    p_all = p_ref[...].astype(jnp.float32)
    u_all = u_ref[...].astype(jnp.float32) * scale   # scale biases the same way
    vb_all = vb_ref[...].astype(jnp.float32) * scale

    parts = []
    for h in range(num_heads):                        # static unrolled head loop
        sl = slice(h * d_head, (h + 1) * d_head)
        qh = q_all[:, sl]                             # (S, dh)
        kh = k_all[:, sl]
        vh = v_all[:, sl]
        ph = p_all[:, sl]
        uh = u_all[h:h + 1, :]                        # (1, dh)
        vbh = vb_all[h:h + 1, :]

        content = jnp.einsum("sd,td->st", qh + uh, kh,
                             preferred_element_type=jnp.float32)      # (S, S)
        pos_raw = jnp.einsum("sd,td->st", qh + vbh, ph,
                             preferred_element_type=jnp.float32)      # (S, S)
        score = content + _rel_shift_vmem(pos_raw)
        # TODO(synk): mask fill (-1e9) and attention dropout not applied (inference).
        score = score - jnp.max(score, axis=-1, keepdims=True)
        e = jnp.exp(score)
        l = jnp.sum(e, axis=-1, keepdims=True)
        # normalize AFTER the PV matmul: O(S*dh) muls instead of O(S^2) divides
        ctx = jnp.dot(e, vh, preferred_element_type=jnp.float32) * (1.0 / l)
        parts.append(ctx)

    # lane-dense (S, D) store: all heads written as one full-width block
    o_ref[0] = jnp.concatenate(parts, axis=-1).astype(o_ref.dtype)


def fused_attention_pallas(qkv, p, u_bias, v_bias, num_heads, scale):
    """qkv: (B, S, 3D) fused projection output; p: (S, D); biases: (H, dh)."""
    B, S, D3 = qkv.shape
    D = D3 // 3
    d_head = D // num_heads
    kernel = functools.partial(
        _fused_attn_kernel, num_heads=num_heads, d_head=d_head, scale=scale
    )
    flops_per_b = num_heads * (2 * S * S * d_head) * 3
    return pl.pallas_call(
        kernel,
        out_shape=jax.ShapeDtypeStruct((B, S, D), qkv.dtype),
        grid_spec=pltpu.PrefetchScalarGridSpec(
            num_scalar_prefetch=0,
            grid=(B,),
            in_specs=[
                # q / k / v are column-blocks of the fused QKV output (no HBM split)
                pl.BlockSpec((1, S, D), lambda b: (b, 0, 0)),
                pl.BlockSpec((1, S, D), lambda b: (b, 0, 1)),
                pl.BlockSpec((1, S, D), lambda b: (b, 0, 2)),
                # batch-invariant blocks: constant index_map -> DMA'd once
                pl.BlockSpec((S, D), lambda b: (0, 0)),
                pl.BlockSpec((num_heads, d_head), lambda b: (0, 0)),
                pl.BlockSpec((num_heads, d_head), lambda b: (0, 0)),
            ],
            out_specs=pl.BlockSpec((1, S, D), lambda b: (b, 0, 0)),
        ),
        compiler_params=pltpu.CompilerParams(dimension_semantics=("parallel",)),
        cost_estimate=pl.CostEstimate(
            flops=B * flops_per_b,
            transcendentals=B * num_heads * S * S,
            bytes_accessed=qkv.dtype.itemsize * (B * S * 4 * D + S * D),
        ),
    )(qkv, qkv, qkv, p, u_bias, v_bias)


# ----------------------------------------------------------------------------
# JAX-side glue (pure layout / tiny ops)
# ----------------------------------------------------------------------------
def sinusoidal_pe(max_len, d_model, dtype=jnp.float32):
    position = jnp.arange(max_len, dtype=jnp.float32)[:, None]
    div_term = jnp.exp(
        jnp.arange(0, d_model, 2, dtype=jnp.float32) * (-(math.log(10000.0) / d_model))
    )
    pe_sin = jnp.sin(position * div_term)
    pe_cos = jnp.cos(position * div_term)
    pe = jnp.stack([pe_sin, pe_cos], axis=-1).reshape(max_len, d_model)
    return pe.astype(dtype)


def relative_shift_ref(pos_score):
    """Pure-JAX Transformer-XL relative shift (reference only)."""
    B, H, S1, S2 = pos_score.shape
    zeros = jnp.zeros((B, H, S1, 1), pos_score.dtype)
    padded = jnp.concatenate([zeros, pos_score], axis=-1)
    padded = padded.reshape(B, H, S2 + 1, S1)
    return padded[:, :, 1:].reshape(B, H, S1, S2)


def init_mhsa_params(key, d_model, num_heads, max_len=256, dtype=jnp.float32):
    dh = d_model // num_heads
    ks = jax.random.split(key, 7)

    def xavier(k, fan_in, fan_out, shape):
        bound = math.sqrt(6.0 / (fan_in + fan_out))
        return jax.random.uniform(k, shape, dtype=dtype, minval=-bound, maxval=bound)

    # Projection weights stored pre-transposed (in_features, out_features);
    # Q/K/V fused along the output dim into a single (D, 3D) weight.
    wq = xavier(ks[0], d_model, d_model, (d_model, d_model))
    wk = xavier(ks[1], d_model, d_model, (d_model, d_model))
    wv = xavier(ks[2], d_model, d_model, (d_model, d_model))
    return dict(
        num_heads=num_heads,
        pe=sinusoidal_pe(max_len, d_model, dtype),
        ln_gamma=jnp.ones((d_model,), dtype),
        ln_beta=jnp.zeros((d_model,), dtype),
        w_qkv=jnp.concatenate([wq, wk, wv], axis=1),
        b_qkv=jnp.zeros((3 * d_model,), dtype),
        w_pos=xavier(ks[3], d_model, d_model, (d_model, d_model)),
        w_out=xavier(ks[4], d_model, d_model, (d_model, d_model)),
        b_out=jnp.zeros((d_model,), dtype),
        u_bias=xavier(ks[5], dh, num_heads, (num_heads, dh)),
        v_bias=xavier(ks[6], dh, num_heads, (num_heads, dh)),
    )


def mhsa_forward(params, inputs, mask=None):
    """MultiHeadedSelfAttentionModule forward (inference: dropout = identity)."""
    assert mask is None  # TODO(synk): optional attention mask not implemented.
    B, S, D = inputs.shape
    H = params["num_heads"]

    # pre-norm
    x2d = layernorm_pallas(
        inputs.reshape(B * S, D), params["ln_gamma"], params["ln_beta"]
    )

    # fused Q/K/V projection (one pass over x) + positional projection (no bias,
    # computed once for (S, D) and broadcast over batch).
    qkv = linear_pallas(x2d, params["w_qkv"], params["b_qkv"])  # (B*S, 3D)
    qkv = qkv.reshape(B, S, 3 * D)                               # contiguous, free
    pos = params["pe"][:S]                                       # (S, D)
    p = linear_pallas(pos, params["w_pos"], None)                # (S, D)

    # fused content-score + pos-score + rel-shift + softmax + PV, scores stay in VMEM
    ctx = fused_attention_pallas(
        qkv, p, params["u_bias"], params["v_bias"], H, 1.0 / math.sqrt(D)
    )                                                            # (B, S, D)

    out = linear_pallas(ctx.reshape(B * S, D), params["w_out"], params["b_out"])
    # TODO(synk): final nn.Dropout -> identity (inference).
    return out.reshape(B, S, D)


# ----------------------------------------------------------------------------
# Pure-JAX reference for correctness checking
# ----------------------------------------------------------------------------
def mhsa_reference(params, inputs):
    B, S, D = inputs.shape
    H = params["num_heads"]
    dh = D // H
    mu = jnp.mean(inputs, -1, keepdims=True)
    var = jnp.mean((inputs - mu) ** 2, -1, keepdims=True)
    x = (inputs - mu) / jnp.sqrt(var + 1e-5) * params["ln_gamma"] + params["ln_beta"]

    w, b = params["w_qkv"], params["b_qkv"]
    q = x @ w[:, :D] + b[:D]
    k = x @ w[:, D:2 * D] + b[D:2 * D]
    v = x @ w[:, 2 * D:] + b[2 * D:]
    pos = jnp.broadcast_to(params["pe"][:S][None], (B, S, D))
    p = pos @ params["w_pos"]

    def heads(t):
        return t.reshape(B, S, H, dh).transpose(0, 2, 1, 3)

    qh, kh, vh, ph = heads(q), heads(k), heads(v), heads(p)
    u = params["u_bias"][None, :, None, :]
    vb = params["v_bias"][None, :, None, :]
    content = jnp.einsum("bhsd,bhtd->bhst", qh + u, kh)
    pos_sc = relative_shift_ref(jnp.einsum("bhsd,bhtd->bhst", qh + vb, ph))
    score = (content + pos_sc) / math.sqrt(D)
    attn = jax.nn.softmax(score, axis=-1)
    ctx = jnp.einsum("bhst,bhtd->bhsd", attn, vh)
    ctx = ctx.transpose(0, 2, 1, 3).reshape(B, S, D)
    return ctx @ params["w_out"] + params["b_out"]


if __name__ == "__main__":
    key = jax.random.PRNGKey(0)
    k_x, k_p = jax.random.split(key)

    batch, seq, d_model, num_heads = 2, 16, 128, 4
    x = jax.random.normal(k_x, (batch, seq, d_model), dtype=jnp.float32)
    params = init_mhsa_params(k_p, d_model, num_heads, max_len=256)

    out = mhsa_forward(params, x)
    out = jax.block_until_ready(out)

    ref = mhsa_reference(params, x)
    assert out.shape == (batch, seq, d_model)
    err = float(jnp.max(jnp.abs(out - ref)))
    assert jnp.allclose(out, ref, atol=1e-3, rtol=1e-3), f"max abs err = {err}"

    print("KERNEL_OK")
</pallas_src>

<mosaic_0001>
module attributes {stable_mosaic.version = 11 : i64} {
  func.func @_layernorm_kernel(%arg0: i32, %arg1: memref<32x128xf32, #tpu.memory_space<vmem>>, %arg2: memref<1x128xf32, #tpu.memory_space<vmem>>, %arg3: memref<1x128xf32, #tpu.memory_space<vmem>>, %arg4: memref<32x128xf32, #tpu.memory_space<vmem>>) attributes {dimension_semantics = [#tpu.dimension_semantics<parallel>], iteration_bounds = array<i64: 1>, scalar_prefetch = 0 : i64, scratch_operands = 0 : i64, tpu.core_type = #tpu.core_type<tc>, window_params = [{transform_indices = @transform_0, window_bounds = array<i64: 32, 128>}, {pipeline_mode = #tpu.pipeline_mode<synchronous>, transform_indices = @transform_1, window_bounds = array<i64: 1, 128>}, {pipeline_mode = #tpu.pipeline_mode<synchronous>, transform_indices = @transform_2, window_bounds = array<i64: 1, 128>}, {transform_indices = @transform_3, window_bounds = array<i64: 32, 128>}]} {
    %c0 = arith.constant 0 : index
    %c0_0 = arith.constant 0 : index
    %0 = vector.load %arg1[%c0, %c0_0] : memref<32x128xf32, #tpu.memory_space<vmem>>, vector<32x128xf32>
    %cst = arith.constant dense<0.000000e+00> : vector<32xf32>
    %1 = vector.multi_reduction <add>, %0, %cst [1] : vector<32x128xf32> to vector<32xf32>
    %2 = vector.shape_cast %1 : vector<32xf32> to vector<32x1xf32>
    %cst_1 = arith.constant 1.280000e+02 : f32
    %3 = vector.broadcast %cst_1 : f32 to vector<32x1xf32>
    %4 = arith.divf %2, %3 : vector<32x1xf32>
    %5 = vector.broadcast %4 : vector<32x1xf32> to vector<32x128xf32>
    %6 = arith.subf %0, %5 : vector<32x128xf32>
    %7 = arith.mulf %6, %6 : vector<32x128xf32>
    %cst_2 = arith.constant dense<0.000000e+00> : vector<32xf32>
    %8 = vector.multi_reduction <add>, %7, %cst_2 [1] : vector<32x128xf32> to vector<32xf32>
    %9 = vector.shape_cast %8 : vector<32xf32> to vector<32x1xf32>
    %cst_3 = arith.constant 1.280000e+02 : f32
    %10 = vector.broadcast %cst_3 : f32 to vector<32x1xf32>
    %11 = arith.divf %9, %10 : vector<32x1xf32>
    %cst_4 = arith.constant 9.99999974E-6 : f32
    %12 = vector.broadcast %cst_4 : f32 to vector<32x1xf32>
    %13 = arith.addf %11, %12 : vector<32x1xf32>
    %14 = math.rsqrt %13 : vector<32x1xf32>
    %15 = vector.broadcast %14 : vector<32x1xf32> to vector<32x128xf32>
    %16 = arith.mulf %6, %15 : vector<32x128xf32>
    %c0_5 = arith.constant 0 : index
    %c0_6 = arith.constant 0 : index
    %17 = vector.load %arg2[%c0_5, %c0_6] : memref<1x128xf32, #tpu.memory_space<vmem>>, vector<1x128xf32>
    %18 = vector.broadcast %17 : vector<1x128xf32> to vector<32x128xf32>
    %19 = arith.mulf %16, %18 : vector<32x128xf32>
    %c0_7 = arith.constant 0 : index
    %c0_8 = arith.constant 0 : index
    %20 = vector.load %arg3[%c0_7, %c0_8] : memref<1x128xf32, #tpu.memory_space<vmem>>, vector<1x128xf32>
    %21 = vector.broadcast %20 : vector<1x128xf32> to vector<32x128xf32>
    %22 = arith.addf %19, %21 : vector<32x128xf32>
    %c0_9 = arith.constant 0 : index
    %c0_10 = arith.constant 0 : index
    %23 = vector.load %arg4[%c0_9, %c0_10] : memref<32x128xf32, #tpu.memory_space<vmem>>, vector<32x128xf32>
    tpu.vector_store %arg4[%c0_9, %c0_10], %22 {strides = array<i32>} : memref<32x128xf32, #tpu.memory_space<vmem>>, vector<32x128xf32>,
    return
  }
  func.func @transform_0(%arg0: i32) -> (i32, i32) {
    %c0_i32 = arith.constant 0 : i32
    %c0_i32_0 = arith.constant 0 : i32
    return %arg0, %c0_i32 : i32, i32
  }
  func.func @transform_1(%arg0: i32) -> (i32, i32) {
    %c0_i32 = arith.constant 0 : i32
    %c0_i32_0 = arith.constant 0 : i32
    %c0_i32_1 = arith.constant 0 : i32
    return %c0_i32, %c0_i32_0 : i32, i32
  }
  func.func @transform_2(%arg0: i32) -> (i32, i32) {
    %c0_i32 = arith.constant 0 : i32
    %c0_i32_0 = arith.constant 0 : i32
    %c0_i32_1 = arith.constant 0 : i32
    return %c0_i32, %c0_i32_0 : i32, i32
  }
  func.func @transform_3(%arg0: i32) -> (i32, i32) {
    %c0_i32 = arith.constant 0 : i32
    %c0_i32_0 = arith.constant 0 : i32
    return %arg0, %c0_i32 : i32, i32
  }
}

</mosaic_0001>

<llo_original>
// kernel: tpu_custom_call.1
$region0: #{tpu_custom_call.1}
  #allocation0 [shape = 'u32[]', space=smem, size = 0x4, offset = 0x4, fixed_abs, tag = 'smem constant byte address 0x4 - core index']
  #allocation1 [shape = 'u32[144,128]{1,0:T(1,128)}', space=vmem, size = 0x12000, scoped, tag = 'internal scratch']
  %s0 = inlined_call_operand.hbm [shape: f32[32,128], index: 0, kind: input, shape index: {}]
  %s1 = inlined_call_operand.vmem [shape: f32[1,128], index: 1, kind: input, shape index: {}]
  %s2 = inlined_call_operand.vmem [shape: f32[1,128], index: 2, kind: input, shape index: {}]
  %s3 = inlined_call_operand.hbm [shape: f32[32,128], index: 3, kind: output, shape index: {}]
  %s4 = sld [smem:[#allocation0]]
  $region26: #{tpu_custom_call.1} parent=0
    _
  %s6 = ssub.s32 1, %s4
  %s7 = scalar_select 0, %s6, %s4
  $region1: #{tpu_custom_call.1} parent=0
    #allocation2 [shape = 'u8[16384]{0}', space=vmem, size = 0x4000, scoped, tag = 'input window, operand 0, single buffered']
    #allocation3 [shape = 's32[1]{0}', space=sflag, size = 0x4, scoped, tag = 'scoped memory for tpu_custom_call.1']
    #allocation4 [shape = 's32[1]{0}', space=sflag, size = 0x4, scoped, tag = 'scoped memory for tpu_custom_call.1']
    #allocation5 [shape = 'u8[16384]{0}', space=vmem, size = 0x4000, scoped, tag = 'output window, operand 0, single buffered']
    %8 = vsyncpa [#allocation3], 0
    %9 = vsyncpa [#allocation4], 0
    // Predicated region
    $region2: #{tpu_custom_call.1} parent=1 // pred_check
      _
    $region3: #{tpu_custom_call.1} parent=1 // pred_check_branch
      %11 = sbr.rel (0) target = $region5
    $region4: #{tpu_custom_call.1} parent=1 // pred_region
      %s13 = ssub.s32 512, 512
      %14 = vsyncadd [#allocation3], %s13
      %s15 = sshll.u32 [#allocation2], 4
      %s16 = int_to_ptr.vmem [resolvable:$true] %s15
      %21 = dma.hbm_to_vmem [thread:$0]  %s0, 512, %s16, [#allocation3], 128, 128, 8
    $region5: #{tpu_custom_call.1} parent=1 // pred_fallthru
      _
    // Predicated region
    $region6: #{tpu_custom_call.1} parent=1 // pred_check
      _
    $region7: #{tpu_custom_call.1} parent=1 // pred_check_branch
      %23 = sbr.rel (0) target = $region9
    $region8: #{tpu_custom_call.1} parent=1 // pred_region
      _
    $region9: #{tpu_custom_call.1} parent=1 // pred_fallthru
      _
    // Predicated region
    $region10: #{tpu_custom_call.1} parent=1 // pred_check
      _
    $region11: #{tpu_custom_call.1} parent=1 // pred_check_branch
      %25 = sbr.rel (0) target = $region13
    $region12: #{tpu_custom_call.1} parent=1 // pred_region
      _
    $region13: #{tpu_custom_call.1} parent=1 // pred_fallthru
      _
    // Predicated region
    $region14: #{tpu_custom_call.1} parent=1 // pred_check
      _
    $region15: #{tpu_custom_call.1} parent=1 // pred_check_branch
      %27 = sbr.rel (0) target = $region17
    $region16: #{tpu_custom_call.1} parent=1 // pred_region
      %28 = dma.done [#allocation3], 512
    $region17: #{tpu_custom_call.1} parent=1 // pred_fallthru
      _
    %v29 = vld [vmem:[#allocation2] sm:$0xff]
    %v30 = vld [vmem:[#allocation2 + $0x8] sm:$0xff]
    %v31 = vld [vmem:[#allocation2 + $0x10] sm:$0xff]
    %v32 = vld [vmem:[#allocation2 + $0x18] sm:$0xff]
    %33 = vadd.xlane.f32.xlu0 %v29
    %v34 = vpop.xlane.xlu0 %33
    %35 = vadd.xlane.f32.xlu0 %v30
    %v36 = vpop.xlane.xlu0 %35
    %37 = vadd.xlane.f32.xlu0 %v31
    %v38 = vpop.xlane.xlu0 %37
    %39 = vadd.xlane.f32.xlu0 %v32
    %v40 = vpop.xlane.xlu0 %39
    %v41 = vrcp.pop 128.0
    %v42 = vmul.f32 %v34, %v41
    %v43 = vmul.f32 %v36, %v41
    %v44 = vmul.f32 %v38, %v41
    %v45 = vmul.f32 %v40, %v41
    %v46 = vsub.f32 %v29, %v42
    %v47 = vsub.f32 %v30, %v43
    %v48 = vsub.f32 %v31, %v44
    %v49 = vsub.f32 %v32, %v45
    %v50 = vmul.f32 %v46, %v46
    %v51 = vmul.f32 %v47, %v47
    %v52 = vmul.f32 %v48, %v48
    %v53 = vmul.f32 %v49, %v49
    %54 = vadd.xlane.f32.xlu0 %v50
    %v55 = vpop.xlane.xlu0 %54
    %56 = vadd.xlane.f32.xlu0 %v51
    %v57 = vpop.xlane.xlu0 %56
    %58 = vadd.xlane.f32.xlu0 %v52
    %v59 = vpop.xlane.xlu0 %58
    %60 = vadd.xlane.f32.xlu0 %v53
    %v61 = vpop.xlane.xlu0 %60
    %v62 = vmul.f32 %v55, %v41
    %v63 = vmul.f32 %v57, %v41
    %v64 = vmul.f32 %v59, %v41
    %v65 = vmul.f32 %v61, %v41
    %v66 = vadd.f32 %v62, 1e-05
    %v67 = vadd.f32 %v63, 1e-05
    %v68 = vadd.f32 %v64, 1e-05
    %v69 = vadd.f32 %v65, 1e-05
    %v70 = vrsqrt.pop %v66
    %v71 = vrsqrt.pop %v67
    %v72 = vrsqrt.pop %v68
    %v73 = vrsqrt.pop %v69
    %v74 = vmul.f32 %v46, %v70
    %v75 = vmul.f32 %v47, %v71
    %v76 = vmul.f32 %v48, %v72
    %v77 = vmul.f32 %v49, %v73
    %v78 = vld [vmem:[%s1] sm:$0x1]
    %v80 = vlaneseq
    %v81 = vshrl.u32 %v80, 7
    %v82 = vsub.s32 0, %v81
    %v83 = vrot.slane %v78, %v82
    %v85 = vmul.f32 %v74, %v83
    %v86 = vmul.f32 %v75, %v83
    %v87 = vmul.f32 %v76, %v83
    %v88 = vmul.f32 %v77, %v83
    %v89 = vld [vmem:[%s2] sm:$0x1]
    %v91 = vlaneseq
    %v92 = vshrl.u32 %v91, 7
    %v93 = vsub.s32 0, %v92
    %v94 = vrot.slane %v89, %v93
    %v96 = vadd.f32 %v85, %v94
    %v97 = vadd.f32 %v86, %v94
    %v98 = vadd.f32 %v87, %v94
    %v99 = vadd.f32 %v88, %v94
    %100 = vst [vmem:[#allocation5] sm:$0xff] %v96
    %101 = vst [vmem:[#allocation5 + $0x8] sm:$0xff] %v97
    %102 = vst [vmem:[#allocation5 + $0x10] sm:$0xff] %v98
    %103 = vst [vmem:[#allocation5 + $0x18] sm:$0xff] %v99
    // Predicated region
    $region18: #{tpu_custom_call.1} parent=1 // pred_check
      _
    $region19: #{tpu_custom_call.1} parent=1 // pred_check_branch
      %105 = sbr.rel (0) target = $region21
    $region20: #{tpu_custom_call.1} parent=1 // pred_region
      %s107 = ssub.s32 512, 512
      %108 = vsyncadd [#allocation4], %s107
      %s109 = sshll.u32 [#allocation5], 4
      %s110 = int_to_ptr.vmem [resolvable:$true] %s109
      %115 = dma.vmem_to_hbm [thread:$0]  %s110, 512, %s3, [#allocation4], 128, 128, 8
    $region21: #{tpu_custom_call.1} parent=1 // pred_fallthru
      _
    // Predicated region
    $region22: #{tpu_custom_call.1} parent=1 // pred_check
      _
    $region23: #{tpu_custom_call.1} parent=1 // pred_check_branch
      %117 = sbr.rel (0) target = $region25
    $region24: #{tpu_custom_call.1} parent=1 // pred_region
      %118 = dma.done [#allocation4], 512
    $region25: #{tpu_custom_call.1} parent=1 // pred_fallthru
      _
    %119 = vsyncpa [#allocation3], 1
    %120 = vsyncpa [#allocation4], 1

</llo_original>
